<compile_context>
chip_gen: v7x
topology: tpu7x:2x2x1
jax: 0.10.0
libtpu: 0.0.40
codegen_flags: <defaults>
</compile_context>

<pallas_src>
import functools

import jax
import jax.numpy as jnp
from jax.experimental import pallas as pl
from jax.experimental.pallas import tpu as pltpu


# ----------------------------- fused Pallas kernel -------------------------- #

def _fused_backbone_head_kernel(
    hw, eps,
    p_ref, w_ref, cb_ref, ww_ref, wb_ref, cw_ref, clb_ref,   # inputs
    sc_ref, logits_ref,                                      # outputs
    acc_ref,                                                 # VMEM scratch
):
    """One grid step = (batch b, spatial tile t).

    Accumulates sum(clamp(relu(conv(x)), eps)^3) over spatial tiles in a VMEM
    scratch; on the last tile of each batch it finalizes GeM pooling and runs
    the whitening + classifier matmuls.  The feature map never hits HBM.
    """
    t = pl.program_id(1)

    @pl.when(t == 0)
    def _init():
        acc_ref[...] = jnp.zeros_like(acc_ref)

    # im2col conv tile: (tm, K) bf16 @ (K, Cf) bf16 -> f32 on the MXU.
    feats = jnp.dot(p_ref[0], w_ref[...], preferred_element_type=jnp.float32)
    feats = jnp.maximum(feats + cb_ref[...], 0.0)        # bias + ReLU   (f32 VPU)
    x = jnp.maximum(feats, eps)                          # GeM clamp(min=eps)
    acc_ref[...] += jnp.sum(x * x * x, axis=0, keepdims=True)   # partial sum of x^p

    @pl.when(t == pl.num_programs(1) - 1)
    def _finalize():
        m = acc_ref[...] * (1.0 / float(hw))             # mean of x^p over HW, > 0
        gem = jnp.exp(jnp.log(m) * (1.0 / 3.0))          # m ** (1/p)  (EUP)
        sc = jnp.dot(gem, ww_ref[...], preferred_element_type=jnp.float32) + wb_ref[...]
        sc_ref[0] = sc
        logits_ref[0] = (
            jnp.dot(sc, cw_ref[...], preferred_element_type=jnp.float32) + clb_ref[...]
        )


def _fused_forward(patches, w2d, conv_b, whit_w, whit_b, cls_w, cls_b,
                   *, spatial_tile=512, eps=1e-6):
    """patches: (B, HW, K) bf16; w2d: (K, Cf) bf16; rest f32 (1, ·)/(·, ·)."""
    B, HW, K = patches.shape
    Cf = w2d.shape[1]
    OD = whit_w.shape[1]
    NC = cls_w.shape[1]

    tm = min(spatial_tile, HW)
    assert HW % tm == 0 and tm % 8 == 0, (HW, tm)
    n_t = HW // tm

    flops = (2 * B * HW * K * Cf          # conv matmul
             + 4 * B * HW * Cf            # bias/relu/clamp/cube epilogue
             + 2 * B * Cf * OD + 2 * B * OD * NC)
    bytes_accessed = (
        patches.size * 2 + w2d.size * 2
        + 4 * (conv_b.size + whit_w.size + whit_b.size + cls_w.size + cls_b.size)
        + 4 * B * (OD + NC)
    )

    kernel = functools.partial(_fused_backbone_head_kernel, HW, eps)

    sc_gem, logits = pl.pallas_call(
        kernel,
        out_shape=(
            jax.ShapeDtypeStruct((B, 1, OD), jnp.float32),
            jax.ShapeDtypeStruct((B, 1, NC), jnp.float32),
        ),
        grid_spec=pltpu.PrefetchScalarGridSpec(
            num_scalar_prefetch=0,
            grid=(B, n_t),
            in_specs=[
                pl.BlockSpec((1, tm, K), lambda b, t: (b, t, 0)),   # patch tile (pipelined)
                pl.BlockSpec((K, Cf), lambda b, t: (0, 0)),         # conv weight (resident)
                pl.BlockSpec((1, Cf), lambda b, t: (0, 0)),         # conv bias
                pl.BlockSpec((Cf, OD), lambda b, t: (0, 0)),        # whitening weight
                pl.BlockSpec((1, OD), lambda b, t: (0, 0)),         # whitening bias
                pl.BlockSpec((OD, NC), lambda b, t: (0, 0)),        # classifier weight
                pl.BlockSpec((1, NC), lambda b, t: (0, 0)),         # classifier bias
            ],
            out_specs=(
                pl.BlockSpec((1, 1, OD), lambda b, t: (b, 0, 0)),
                pl.BlockSpec((1, 1, NC), lambda b, t: (b, 0, 0)),
            ),
            scratch_shapes=[pltpu.VMEM((1, Cf), jnp.float32)],      # GeM accumulator
        ),
        compiler_params=pltpu.CompilerParams(
            dimension_semantics=("parallel", "arbitrary"),
            vmem_limit_bytes=32 * 1024 * 1024,
        ),
        cost_estimate=pl.CostEstimate(
            flops=flops, transcendentals=2 * B * Cf, bytes_accessed=bytes_accessed),
    )(patches, w2d, conv_b, whit_w, whit_b, cls_w, cls_b)

    return sc_gem[:, 0, :], logits[:, 0, :]


# ------------------------------- JAX wrapper -------------------------------- #

def adaptive_hybrid_wrapper_forward(x_nchw, params, return_features=False,
                                    spatial_tile=512):
    """Mirrors AdaptiveHybridWrapper.forward.  x_nchw: (B, Cin, H, W) float32."""
    x_nhwc = jnp.transpose(x_nchw, (0, 2, 3, 1)).astype(jnp.float32)
    B, H, W, Cin = x_nhwc.shape
    conv_w = params["conv_w"]                       # (Cf, Cin, 3, 3)
    Cf = conv_w.shape[0]

    xp = jnp.pad(x_nhwc, ((0, 0), (1, 1), (1, 1), (0, 0)))
    # im2col patches ordered [pos, (ki,kj), cin]; bf16 MXU operands.
    patches = jnp.stack(
        [xp[:, i:i + H, j:j + W, :] for i in range(3) for j in range(3)], axis=3,
    ).reshape(B, H * W, 9 * Cin).astype(jnp.bfloat16)
    w2d = jnp.transpose(conv_w, (2, 3, 1, 0)).reshape(9 * Cin, Cf).astype(jnp.bfloat16)

    sc_gem, logits = _fused_forward(
        patches, w2d,
        params["conv_b"].reshape(1, Cf).astype(jnp.float32),
        params["whit_w"].astype(jnp.float32),
        params["whit_b"].reshape(1, -1).astype(jnp.float32),
        params["cls_w"].astype(jnp.float32),
        params["cls_b"].reshape(1, -1).astype(jnp.float32),
        spatial_tile=spatial_tile,
    )
    return sc_gem if return_features else logits


def init_params(key, cin=3, cf=128, output_dim=32, num_classes=10):
    k = jax.random.split(key, 6)
    return {
        "conv_w": 0.1 * jax.random.normal(k[0], (cf, cin, 3, 3), jnp.float32),
        "conv_b": 0.1 * jax.random.normal(k[1], (cf,), jnp.float32),
        "whit_w": 0.1 * jax.random.normal(k[2], (cf, output_dim), jnp.float32),
        "whit_b": 0.1 * jax.random.normal(k[3], (output_dim,), jnp.float32),
        "cls_w": 0.1 * jax.random.normal(k[4], (output_dim, num_classes), jnp.float32),
        "cls_b": 0.1 * jax.random.normal(k[5], (num_classes,), jnp.float32),
    }


# ------------------------- pure-JAX numerical reference --------------------- #

def _reference_forward(x_nchw, params, return_features=False):
    x_nhwc = jnp.transpose(x_nchw, (0, 2, 3, 1)).astype(jnp.float32)
    B, H, W, Cin = x_nhwc.shape
    Cf = params["conv_w"].shape[0]
    xp = jnp.pad(x_nhwc, ((0, 0), (1, 1), (1, 1), (0, 0)))
    patches = jnp.stack(
        [xp[:, i:i + H, j:j + W, :] for i in range(3) for j in range(3)], axis=3,
    ).reshape(B, H * W, 9 * Cin).astype(jnp.bfloat16).astype(jnp.float32)
    w2d = jnp.transpose(params["conv_w"], (2, 3, 1, 0)).reshape(9 * Cin, Cf)
    w2d = w2d.astype(jnp.bfloat16).astype(jnp.float32)
    feats = jnp.maximum(jnp.einsum("bnk,kc->bnc", patches, w2d) + params["conv_b"], 0.0)
    gem = jnp.mean(jnp.maximum(feats, 1e-6) ** 3.0, axis=1) ** (1.0 / 3.0)
    sc = gem @ params["whit_w"] + params["whit_b"]
    if return_features:
        return sc
    return sc @ params["cls_w"] + params["cls_b"]


if __name__ == "__main__":
    key = jax.random.PRNGKey(0)
    kx, kp = jax.random.split(key)
    B, Cin, H, W = 2, 3, 16, 16
    x = jax.random.normal(kx, (B, Cin, H, W), jnp.float32)
    params = init_params(kp, cin=Cin, cf=128, output_dim=32, num_classes=10)

    # spatial_tile=64 exercises the multi-step accumulator pipeline at these toy
    # shapes; at production sizes use 512-1024 (v7x, 64 MiB VMEM) / up to 2048
    # (v5e/v6e, 128 MiB VMEM).
    @jax.jit
    def run_logits(x, params):
        return adaptive_hybrid_wrapper_forward(x, params, return_features=False,
                                               spatial_tile=64)

    @jax.jit
    def run_feats(x, params):
        return adaptive_hybrid_wrapper_forward(x, params, return_features=True,
                                               spatial_tile=64)

    logits = run_logits(x, params)
    feats = run_feats(x, params)
    jax.block_until_ready((logits, feats))

    assert logits.shape == (B, 10) and feats.shape == (B, 32)

    ref_logits = _reference_forward(x, params, return_features=False)
    ref_feats = _reference_forward(x, params, return_features=True)
    assert jnp.allclose(logits, ref_logits, rtol=1e-2, atol=1e-2)
    assert jnp.allclose(feats, ref_feats, rtol=1e-2, atol=1e-2)

    print("KERNEL_OK")
</pallas_src>

<mosaic_0001>
module attributes {stable_mosaic.version = 11 : i64} {
  func.func @_fused_backbone_head_kernel(%arg0: i32, %arg1: i32, %arg2: memref<1x64x27xbf16, #tpu.memory_space<vmem>>, %arg3: memref<27x128xbf16, #tpu.memory_space<vmem>>, %arg4: memref<1x128xf32, #tpu.memory_space<vmem>>, %arg5: memref<128x32xf32, #tpu.memory_space<vmem>>, %arg6: memref<1x32xf32, #tpu.memory_space<vmem>>, %arg7: memref<32x10xf32, #tpu.memory_space<vmem>>, %arg8: memref<1x10xf32, #tpu.memory_space<vmem>>, %arg9: memref<1x1x32xf32, #tpu.memory_space<vmem>>, %arg10: memref<1x1x10xf32, #tpu.memory_space<vmem>>, %arg11: memref<1x128xf32, #tpu.memory_space<vmem>>) attributes {dimension_semantics = [#tpu.dimension_semantics<parallel>, #tpu.dimension_semantics<arbitrary>], iteration_bounds = array<i64: 2, 4>, scalar_prefetch = 0 : i64, scratch_operands = 1 : i64, tpu.core_type = #tpu.core_type<tc>, window_params = [{transform_indices = @transform_0, window_bounds = array<i64: 1, 64, 27>}, {pipeline_mode = #tpu.pipeline_mode<synchronous>, transform_indices = @transform_1, window_bounds = array<i64: 27, 128>}, {pipeline_mode = #tpu.pipeline_mode<synchronous>, transform_indices = @transform_2, window_bounds = array<i64: 1, 128>}, {pipeline_mode = #tpu.pipeline_mode<synchronous>, transform_indices = @transform_3, window_bounds = array<i64: 128, 32>}, {pipeline_mode = #tpu.pipeline_mode<synchronous>, transform_indices = @transform_4, window_bounds = array<i64: 1, 32>}, {pipeline_mode = #tpu.pipeline_mode<synchronous>, transform_indices = @transform_5, window_bounds = array<i64: 32, 10>}, {pipeline_mode = #tpu.pipeline_mode<synchronous>, transform_indices = @transform_6, window_bounds = array<i64: 1, 10>}, {transform_indices = @transform_7, window_bounds = array<i64: 1, 1, 32>}, {transform_indices = @transform_8, window_bounds = array<i64: 1, 1, 10>}]} {
    %c0_i32 = arith.constant 0 : i32
    %0 = arith.cmpi eq, %arg1, %c0_i32 : i32
    %1 = arith.extui %0 : i1 to i32
    %c0_i32_0 = arith.constant 0 : i32
    %2 = arith.cmpi ne, %1, %c0_i32_0 : i32
    scf.if %2 {
      %cst_15 = arith.constant 0.000000e+00 : f32
      %24 = vector.broadcast %cst_15 : f32 to vector<1x128xf32>
      %c0_16 = arith.constant 0 : index
      %c0_17 = arith.constant 0 : index
      %25 = vector.load %arg11[%c0_16, %c0_17] : memref<1x128xf32, #tpu.memory_space<vmem>>, vector<1x128xf32>
      tpu.vector_store %arg11[%c0_16, %c0_17], %24 {strides = array<i32>} : memref<1x128xf32, #tpu.memory_space<vmem>>, vector<1x128xf32>,
    } else {
    }
    %c0 = arith.constant 0 : index
    %c0_1 = arith.constant 0 : index
    %c0_2 = arith.constant 0 : index
    %3 = vector.load %arg2[%c0, %c0_1, %c0_2] : memref<1x64x27xbf16, #tpu.memory_space<vmem>>, vector<1x64x27xbf16>
    %4 = vector.shape_cast %3 : vector<1x64x27xbf16> to vector<64x27xbf16>
    %c0_3 = arith.constant 0 : index
    %c0_4 = arith.constant 0 : index
    %5 = vector.load %arg3[%c0_3, %c0_4] : memref<27x128xbf16, #tpu.memory_space<vmem>>, vector<27x128xbf16>
    %cst = arith.constant dense<0.000000e+00> : vector<64x128xf32>
    %6 = tpu.matmul %4, %5, %cst {dimension_numbers = #tpu.dot_dimension_numbers<[1], [0], [0], [1], [0, 0, 1, 1], [], []>} : vector<64x27xbf16>, vector<27x128xbf16>, vector<64x128xf32> -> vector<64x128xf32>
    %c0_5 = arith.constant 0 : index
    %c0_6 = arith.constant 0 : index
    %7 = vector.load %arg4[%c0_5, %c0_6] : memref<1x128xf32, #tpu.memory_space<vmem>>, vector<1x128xf32>
    %8 = vector.broadcast %7 : vector<1x128xf32> to vector<64x128xf32>
    %9 = arith.addf %6, %8 : vector<64x128xf32>
    %cst_7 = arith.constant 0.000000e+00 : f32
    %10 = vector.broadcast %cst_7 : f32 to vector<64x128xf32>
    %11 = arith.maximumf %9, %10 : vector<64x128xf32>
    %cst_8 = arith.constant 9.99999997E-7 : f32
    %12 = vector.broadcast %cst_8 : f32 to vector<64x128xf32>
    %13 = arith.maximumf %11, %12 : vector<64x128xf32>
    %c0_9 = arith.constant 0 : index
    %c0_10 = arith.constant 0 : index
    %14 = vector.load %arg11[%c0_9, %c0_10] : memref<1x128xf32, #tpu.memory_space<vmem>>, vector<1x128xf32>
    %15 = arith.mulf %13, %13 : vector<64x128xf32>
    %16 = arith.mulf %15, %13 : vector<64x128xf32>
    %cst_11 = arith.constant dense<0.000000e+00> : vector<128xf32>
    %17 = vector.multi_reduction <add>, %16, %cst_11 [0] : vector<64x128xf32> to vector<128xf32>
    %18 = vector.shape_cast %17 : vector<128xf32> to vector<1x128xf32>
    %19 = arith.addf %14, %18 : vector<1x128xf32>
    %c0_12 = arith.constant 0 : index
    %c0_13 = arith.constant 0 : index
    %20 = vector.load %arg11[%c0_12, %c0_13] : memref<1x128xf32, #tpu.memory_space<vmem>>, vector<1x128xf32>
    tpu.vector_store %arg11[%c0_12, %c0_13], %19 {strides = array<i32>} : memref<1x128xf32, #tpu.memory_space<vmem>>, vector<1x128xf32>,
    %c3_i32 = arith.constant 3 : i32
    %21 = arith.cmpi eq, %arg1, %c3_i32 : i32
    %22 = arith.extui %21 : i1 to i32
    %c0_i32_14 = arith.constant 0 : i32
    %23 = arith.cmpi ne, %22, %c0_i32_14 : i32
    scf.if %23 {
      %c0_15 = arith.constant 0 : index
      %c0_16 = arith.constant 0 : index
      %24 = vector.load %arg11[%c0_15, %c0_16] : memref<1x128xf32, #tpu.memory_space<vmem>>, vector<1x128xf32>
      %cst_17 = arith.constant 3.906250e-03 : f32
      %25 = vector.broadcast %cst_17 : f32 to vector<1x128xf32>
      %26 = arith.mulf %24, %25 : vector<1x128xf32>
      %27 = math.log %26 : vector<1x128xf32>
      %cst_18 = arith.constant 0.333333343 : f32
      %28 = vector.broadcast %cst_18 : f32 to vector<1x128xf32>
      %29 = arith.mulf %27, %28 : vector<1x128xf32>
      %30 = math.exp %29 : vector<1x128xf32>
      %c0_19 = arith.constant 0 : index
      %c0_20 = arith.constant 0 : index
      %31 = vector.load %arg5[%c0_19, %c0_20] : memref<128x32xf32, #tpu.memory_space<vmem>>, vector<128x32xf32>
      %cst_21 = arith.constant dense<0.000000e+00> : vector<1x32xf32>
      %32 = tpu.matmul %30, %31, %cst_21 {dimension_numbers = #tpu.dot_dimension_numbers<[1], [0], [0], [1], [0, 0, 1, 1], [], []>} : vector<1x128xf32>, vector<128x32xf32>, vector<1x32xf32> -> vector<1x32xf32>
      %c0_22 = arith.constant 0 : index
      %c0_23 = arith.constant 0 : index
      %33 = vector.load %arg6[%c0_22, %c0_23] : memref<1x32xf32, #tpu.memory_space<vmem>>, vector<1x32xf32>
      %34 = arith.addf %32, %33 : vector<1x32xf32>
      %c0_24 = arith.constant 0 : index
      %c0_25 = arith.constant 0 : index
      %c0_26 = arith.constant 0 : index
      %35 = vector.load %arg9[%c0_24, %c0_25, %c0_26] : memref<1x1x32xf32, #tpu.memory_space<vmem>>, vector<1x1x32xf32>
      %36 = vector.shape_cast %35 : vector<1x1x32xf32> to vector<1x32xf32>
      %37 = vector.shape_cast %34 : vector<1x32xf32> to vector<1x1x32xf32>
      tpu.vector_store %arg9[%c0_24, %c0_25, %c0_26], %37 {strides = array<i32>} : memref<1x1x32xf32, #tpu.memory_space<vmem>>, vector<1x1x32xf32>,
      %c0_27 = arith.constant 0 : index
      %c0_28 = arith.constant 0 : index
      %38 = vector.load %arg7[%c0_27, %c0_28] : memref<32x10xf32, #tpu.memory_space<vmem>>, vector<32x10xf32>
      %cst_29 = arith.constant dense<0.000000e+00> : vector<1x10xf32>
      %39 = tpu.matmul %34, %38, %cst_29 {dimension_numbers = #tpu.dot_dimension_numbers<[1], [0], [0], [1], [0, 0, 1, 1], [], []>} : vector<1x32xf32>, vector<32x10xf32>, vector<1x10xf32> -> vector<1x10xf32>
      %c0_30 = arith.constant 0 : index
      %c0_31 = arith.constant 0 : index
      %40 = vector.load %arg8[%c0_30, %c0_31] : memref<1x10xf32, #tpu.memory_space<vmem>>, vector<1x10xf32>
      %41 = arith.addf %39, %40 : vector<1x10xf32>
      %c0_32 = arith.constant 0 : index
      %c0_33 = arith.constant 0 : index
      %c0_34 = arith.constant 0 : index
      %42 = vector.load %arg10[%c0_32, %c0_33, %c0_34] : memref<1x1x10xf32, #tpu.memory_space<vmem>>, vector<1x1x10xf32>
      %43 = vector.shape_cast %42 : vector<1x1x10xf32> to vector<1x10xf32>
      %44 = vector.shape_cast %41 : vector<1x10xf32> to vector<1x1x10xf32>
      tpu.vector_store %arg10[%c0_32, %c0_33, %c0_34], %44 {strides = array<i32>} : memref<1x1x10xf32, #tpu.memory_space<vmem>>, vector<1x1x10xf32>,
    } else {
    }
    return
  }
  func.func @transform_0(%arg0: i32, %arg1: i32) -> (i32, i32, i32) {
    %c0_i32 = arith.constant 0 : i32
    %c0_i32_0 = arith.constant 0 : i32
    return %arg0, %arg1, %c0_i32 : i32, i32, i32
  }
  func.func @transform_1(%arg0: i32, %arg1: i32) -> (i32, i32) {
    %c0_i32 = arith.constant 0 : i32
    %c0_i32_0 = arith.constant 0 : i32
    %c0_i32_1 = arith.constant 0 : i32
    return %c0_i32, %c0_i32_0 : i32, i32
  }
  func.func @transform_2(%arg0: i32, %arg1: i32) -> (i32, i32) {
    %c0_i32 = arith.constant 0 : i32
    %c0_i32_0 = arith.constant 0 : i32
    %c0_i32_1 = arith.constant 0 : i32
    return %c0_i32, %c0_i32_0 : i32, i32
  }
  func.func @transform_3(%arg0: i32, %arg1: i32) -> (i32, i32) {
    %c0_i32 = arith.constant 0 : i32
    %c0_i32_0 = arith.constant 0 : i32
    %c0_i32_1 = arith.constant 0 : i32
    return %c0_i32, %c0_i32_0 : i32, i32
  }
  func.func @transform_4(%arg0: i32, %arg1: i32) -> (i32, i32) {
    %c0_i32 = arith.constant 0 : i32
    %c0_i32_0 = arith.constant 0 : i32
    %c0_i32_1 = arith.constant 0 : i32
    return %c0_i32, %c0_i32_0 : i32, i32
  }
  func.func @transform_5(%arg0: i32, %arg1: i32) -> (i32, i32) {
    %c0_i32 = arith.constant 0 : i32
    %c0_i32_0 = arith.constant 0 : i32
    %c0_i32_1 = arith.constant 0 : i32
    return %c0_i32, %c0_i32_0 : i32, i32
  }
  func.func @transform_6(%arg0: i32, %arg1: i32) -> (i32, i32) {
    %c0_i32 = arith.constant 0 : i32
    %c0_i32_0 = arith.constant 0 : i32
    %c0_i32_1 = arith.constant 0 : i32
    return %c0_i32, %c0_i32_0 : i32, i32
  }
  func.func @transform_7(%arg0: i32, %arg1: i32) -> (i32, i32, i32) {
    %c0_i32 = arith.constant 0 : i32
    %c0_i32_0 = arith.constant 0 : i32
    %c0_i32_1 = arith.constant 0 : i32
    return %arg0, %c0_i32, %c0_i32_0 : i32, i32, i32
  }
  func.func @transform_8(%arg0: i32, %arg1: i32) -> (i32, i32, i32) {
    %c0_i32 = arith.constant 0 : i32
    %c0_i32_0 = arith.constant 0 : i32
    %c0_i32_1 = arith.constant 0 : i32
    return %arg0, %c0_i32, %c0_i32_0 : i32, i32, i32
  }
}

</mosaic_0001>

<llo_original>
// kernel: run_logits.1
$region0: #{run_logits.1}
  #allocation0 [shape = 'u32[]', space=smem, size = 0x4, offset = 0x4, fixed_abs, tag = 'smem constant byte address 0x4 - core index']
  #allocation1 [shape = 'u32[144,128]{1,0:T(1,128)}', space=vmem, size = 0x12000, scoped, tag = 'internal scratch']
  #allocation2 [shape = 'f32[1,128]{1,0:T(1,128)}', space=vmem, size = 0x200, scoped, tag = 'scratch operand']
  %s0 = inlined_call_operand.vmem [shape: bf16[2,256,27], index: 0, kind: input, shape index: {}]
  %s1 = inlined_call_operand.vmem [shape: bf16[27,128], index: 1, kind: input, shape index: {}]
  %s2 = inlined_call_operand.vmem [shape: f32[1,128], index: 2, kind: input, shape index: {}]
  %s3 = inlined_call_operand.vmem [shape: f32[128,32], index: 3, kind: input, shape index: {}]
  %s4 = inlined_call_operand.vmem [shape: f32[1,32], index: 4, kind: input, shape index: {}]
  %s5 = inlined_call_operand.vmem [shape: f32[32,10], index: 5, kind: input, shape index: {}]
  %s6 = inlined_call_operand.vmem [shape: f32[1,10], index: 6, kind: input, shape index: {}]
  %s7 = inlined_call_operand.hbm [shape: f32[2,1,32], index: 7, kind: output, shape index: {0}]
  %s8 = inlined_call_operand.hbm [shape: f32[2,1,10], index: 8, kind: output, shape index: {1}]
  %9 = xla_tuple %s7, %s8
  %s10 = sld [smem:[#allocation0]]
  $region77: #{run_logits.1} parent=0
    _
  %s12 = ssub.s32 1, %s10
  %s13 = scalar_select 0, %s12, %s10
  $region1: #{run_logits.1} parent=0
    #allocation3 [shape = 'u8[1024]{0}', space=vmem, size = 0x400, scoped, tag = 'output window, operand 0']
    #allocation4 [shape = 's32[2]{0}', space=sflag, size = 0x8, scoped, tag = 'scoped memory for run_logits.1']
    #allocation5 [shape = 'u8[1024]{0}', space=vmem, size = 0x400, scoped, tag = 'output window, operand 1']
    #allocation6 [shape = 's32[2]{0}', space=sflag, size = 0x8, scoped, tag = 'scoped memory for run_logits.1']
    %14 = vsyncpa [#allocation4], 0
    %s15 = scalar_lea.sflag [#allocation4], 1
    %16 = vsyncpa %s15, 0
    %17 = vsyncpa [#allocation6], 0
    %s18 = scalar_lea.sflag [#allocation6], 1
    %19 = vsyncpa %s18, 0
    loop: start=0, step=1, limit=10
    $region2: #{run_logits.1} parent=1 // loop_pre_header
      _
    $region3: #{run_logits.1} parent=1 // loop_header
      %s21 = sphi 0, %s25
      %p22 = scmp.ge.s32.totalorder %s21, 10
      %s28 = sphi 0, %s40
      %s29 = sphi 0, %s36
      %s30 = sphi 0, %s28
      %s31 = sphi 0, %s29
      %s32 = sphi 0, %s30
      %s33 = sphi 0, %s31
      %s45 = sphi 0, %s47
      %s48 = sphi 0, %s45
      %s49 = sphi 0, %s48
      %s65 = sphi 0, %s49
      %s69 = sphi 0, %s69
      %s71 = sphi 0, %s69
      %s72 = sphi 0, %s71
      %s86 = sphi 0, %s72
      %s90 = sphi 0, %s90
      %s92 = sphi 0, %s90
      %s93 = sphi 0, %s92
      %s107 = sphi 0, %s93
      %s111 = sphi 0, %s111
      %s113 = sphi 0, %s111
      %s114 = sphi 0, %s113
      %s128 = sphi 0, %s114
      %s132 = sphi 0, %s132
      %s134 = sphi 0, %s132
      %s135 = sphi 0, %s134
      %s149 = sphi 0, %s135
      %s153 = sphi 0, %s153
      %s155 = sphi 0, %s153
      %s156 = sphi 0, %s155
      %s170 = sphi 0, %s156
      %s174 = sphi 0, %s174
      %s176 = sphi 0, %s174
      %s177 = sphi 0, %s176
      %s191 = sphi 0, %s177
      %s197 = sphi 0, %s199
      %s200 = sphi 0, %s197
      %s201 = sphi 0, %s200
      %s217 = sphi 0, %s201
      %s223 = sphi 0, %s225
      %s226 = sphi 0, %s223
      %s227 = sphi 0, %s226
      %s243 = sphi 0, %s227
    $region4: #{run_logits.1} parent=1 // loop_header_branch
      %24 = sbr.rel (%p22) target = $region8
    $region5: #{run_logits.1} parent=1 // loop_body
      %s26 = ssub.s32 %s21, 1
      %s27 = ssub.s32 %s21, 2
      %s34 = sadd.s32 1, %s29
      %p35 = scmp.ge.s32.totalorder %s34, 4
      %s36 = scalar_select %p35, 0, %s34
      %s37 = sadd.s32 1, %s28
      %s38 = scalar_select %p35, %s37, %s28
      %p39 = scmp.ge.s32.totalorder %s38, 2
      %s40 = scalar_select %p39, 0, %s38
      %s41 = ssub.s32 %s28, %s40
      %s42 = ssub.s32 %s29, %s36
      %s43 = sor.u32 %s41, %s42
      %p44 = scmp.eq.s32.totalorder %s43, 0
      %s46 = sadd.s32 %s45, 1
      %s47 = scalar_select %p44, %s45, %s46
      %p50 = pneg %p44
      %p51 = scmp.eq.s32.totalorder %s21, 7
      %p52 = por %p50, %p51
      %p53 = scmp.ne.s32.totalorder %s45, %s48
      %p54 = scmp.eq.s32.totalorder %s21, 0
      %p55 = por %p53, %p54
      %p56 = scmp.ne.s32.totalorder %s45, %s48
      %p57 = scmp.eq.s32.totalorder %s26, 7
      %p58 = por %p56, %p57
      %p59 = scmp.ne.s32.totalorder %s48, %s49
      %p60 = scmp.eq.s32.totalorder %s26, 0
      %p61 = por %p59, %p60
      %p62 = scmp.ne.s32.totalorder %s48, %s49
      %p63 = scmp.eq.s32.totalorder %s27, 7
      %p64 = por %p62, %p63
      %p66 = scmp.ne.s32.totalorder %s49, %s65
      %p67 = scmp.eq.s32.totalorder %s27, 0
      %p68 = por %p66, %p67
      %s70 = sadd.s32 %s69, 1
      %p73 = scmp.eq.s32.totalorder %s21, 7
      %p74 = scmp.ne.s32.totalorder %s69, %s71
      %p75 = scmp.eq.s32.totalorder %s21, 0
      %p76 = por %p74, %p75
      %p77 = scmp.ne.s32.totalorder %s69, %s71
      %p78 = scmp.eq.s32.totalorder %s26, 7
      %p79 = por %p77, %p78
      %p80 = scmp.ne.s32.totalorder %s71, %s72
      %p81 = scmp.eq.s32.totalorder %s26, 0
      %p82 = por %p80, %p81
      %p83 = scmp.ne.s32.totalorder %s71, %s72
      %p84 = scmp.eq.s32.totalorder %s27, 7
      %p85 = por %p83, %p84
      %p87 = scmp.ne.s32.totalorder %s72, %s86
      %p88 = scmp.eq.s32.totalorder %s27, 0
      %p89 = por %p87, %p88
      %s91 = sadd.s32 %s90, 1
      %p94 = scmp.eq.s32.totalorder %s21, 7
      %p95 = scmp.ne.s32.totalorder %s90, %s92
      %p96 = scmp.eq.s32.totalorder %s21, 0
      %p97 = por %p95, %p96
      %p98 = scmp.ne.s32.totalorder %s90, %s92
      %p99 = scmp.eq.s32.totalorder %s26, 7
      %p100 = por %p98, %p99
      %p101 = scmp.ne.s32.totalorder %s92, %s93
      %p102 = scmp.eq.s32.totalorder %s26, 0
      %p103 = por %p101, %p102
      %p104 = scmp.ne.s32.totalorder %s92, %s93
      %p105 = scmp.eq.s32.totalorder %s27, 7
      %p106 = por %p104, %p105
      %p108 = scmp.ne.s32.totalorder %s93, %s107
      %p109 = scmp.eq.s32.totalorder %s27, 0
      %p110 = por %p108, %p109
      %s112 = sadd.s32 %s111, 1
      %p115 = scmp.eq.s32.totalorder %s21, 7
      %p116 = scmp.ne.s32.totalorder %s111, %s113
      %p117 = scmp.eq.s32.totalorder %s21, 0
      %p118 = por %p116, %p117
      %p119 = scmp.ne.s32.totalorder %s111, %s113
      %p120 = scmp.eq.s32.totalorder %s26, 7
      %p121 = por %p119, %p120
      %p122 = scmp.ne.s32.totalorder %s113, %s114
      %p123 = scmp.eq.s32.totalorder %s26, 0
      %p124 = por %p122, %p123
      %p125 = scmp.ne.s32.totalorder %s113, %s114
      %p126 = scmp.eq.s32.totalorder %s27, 7
      %p127 = por %p125, %p126
      %p129 = scmp.ne.s32.totalorder %s114, %s128
      %p130 = scmp.eq.s32.totalorder %s27, 0
      %p131 = por %p129, %p130
      %s133 = sadd.s32 %s132, 1
      %p136 = scmp.eq.s32.totalorder %s21, 7
      %p137 = scmp.ne.s32.totalorder %s132, %s134
      %p138 = scmp.eq.s32.totalorder %s21, 0
      %p139 = por %p137, %p138
      %p140 = scmp.ne.s32.totalorder %s132, %s134
      %p141 = scmp.eq.s32.totalorder %s26, 7
      %p142 = por %p140, %p141
      %p143 = scmp.ne.s32.totalorder %s134, %s135
      %p144 = scmp.eq.s32.totalorder %s26, 0
      %p145 = por %p143, %p144
      %p146 = scmp.ne.s32.totalorder %s134, %s135
      %p147 = scmp.eq.s32.totalorder %s27, 7
      %p148 = por %p146, %p147
      %p150 = scmp.ne.s32.totalorder %s135, %s149
      %p151 = scmp.eq.s32.totalorder %s27, 0
      %p152 = por %p150, %p151
      %s154 = sadd.s32 %s153, 1
      %p157 = scmp.eq.s32.totalorder %s21, 7
      %p158 = scmp.ne.s32.totalorder %s153, %s155
      %p159 = scmp.eq.s32.totalorder %s21, 0
      %p160 = por %p158, %p159
      %p161 = scmp.ne.s32.totalorder %s153, %s155
      %p162 = scmp.eq.s32.totalorder %s26, 7
      %p163 = por %p161, %p162
      %p164 = scmp.ne.s32.totalorder %s155, %s156
      %p165 = scmp.eq.s32.totalorder %s26, 0
      %p166 = por %p164, %p165
      %p167 = scmp.ne.s32.totalorder %s155, %s156
      %p168 = scmp.eq.s32.totalorder %s27, 7
      %p169 = por %p167, %p168
      %p171 = scmp.ne.s32.totalorder %s156, %s170
      %p172 = scmp.eq.s32.totalorder %s27, 0
      %p173 = por %p171, %p172
      %s175 = sadd.s32 %s174, 1
      %p178 = scmp.eq.s32.totalorder %s21, 7
      %p179 = scmp.ne.s32.totalorder %s174, %s176
      %p180 = scmp.eq.s32.totalorder %s21, 0
      %p181 = por %p179, %p180
      %p182 = scmp.ne.s32.totalorder %s174, %s176
      %p183 = scmp.eq.s32.totalorder %s26, 7
      %p184 = por %p182, %p183
      %p185 = scmp.ne.s32.totalorder %s176, %s177
      %p186 = scmp.eq.s32.totalorder %s26, 0
      %p187 = por %p185, %p186
      %p188 = scmp.ne.s32.totalorder %s176, %s177
      %p189 = scmp.eq.s32.totalorder %s27, 7
      %p190 = por %p188, %p189
      %p192 = scmp.ne.s32.totalorder %s177, %s191
      %p193 = scmp.eq.s32.totalorder %s27, 0
      %p194 = por %p192, %p193
      %s195 = ssub.s32 %s28, %s40
      %p196 = scmp.eq.s32.totalorder %s195, 0
      %s198 = sadd.s32 %s197, 1
      %s199 = scalar_select %p196, %s197, %s198
      %p202 = pneg %p196
      %p203 = scmp.eq.s32.totalorder %s21, 7
      %p204 = por %p202, %p203
      %p205 = scmp.ne.s32.totalorder %s197, %s200
      %p206 = scmp.eq.s32.totalorder %s21, 0
      %p207 = por %p205, %p206
      %p208 = scmp.ne.s32.totalorder %s197, %s200
      %p209 = scmp.eq.s32.totalorder %s26, 7
      %p210 = por %p208, %p209
      %p211 = scmp.ne.s32.totalorder %s200, %s201
      %p212 = scmp.eq.s32.totalorder %s26, 0
      %p213 = por %p211, %p212
      %p214 = scmp.ne.s32.totalorder %s200, %s201
      %p215 = scmp.eq.s32.totalorder %s27, 7
      %p216 = por %p214, %p215
      %p218 = scmp.ne.s32.totalorder %s201, %s217
      %p219 = scmp.eq.s32.totalorder %s27, 0
      %p220 = por %p218, %p219
      %s221 = ssub.s32 %s28, %s40
      %p222 = scmp.eq.s32.totalorder %s221, 0
      %s224 = sadd.s32 %s223, 1
      %s225 = scalar_select %p222, %s223, %s224
      %p228 = pneg %p222
      %p229 = scmp.eq.s32.totalorder %s21, 7
      %p230 = por %p228, %p229
      %p231 = scmp.ne.s32.totalorder %s223, %s226
      %p232 = scmp.eq.s32.totalorder %s21, 0
      %p233 = por %p231, %p232
      %p234 = scmp.ne.s32.totalorder %s223, %s226
      %p235 = scmp.eq.s32.totalorder %s26, 7
      %p236 = por %p234, %p235
      %p237 = scmp.ne.s32.totalorder %s226, %s227
      %p238 = scmp.eq.s32.totalorder %s26, 0
      %p239 = por %p237, %p238
      %p240 = scmp.ne.s32.totalorder %s226, %s227
      %p241 = scmp.eq.s32.totalorder %s27, 7
      %p242 = por %p240, %p241
      %p244 = scmp.ne.s32.totalorder %s227, %s243
      %p245 = scmp.eq.s32.totalorder %s27, 0
      %p246 = por %p244, %p245
      %p247 = scmp.le.s32.totalorder 1, %s21
      %p248 = scmp.lt.s32.totalorder %s21, 9
      %p249 = pnand %p247, %p248
      %p250 = pneg %p249
      // Predicated region
      $region9: #{run_logits.1} parent=5 // pred_check
        _
      $region10: #{run_logits.1} parent=5 // pred_check_branch
        %252 = sbr.rel (%p249) target = $region12
      $region11: #{run_logits.1} parent=5 // pred_region
        %s253 = ssub.s32 %s21, 1
        // Predicated region
        $region13: #{run_logits.1} parent=11 // pred_check
          %p254 = pneg %p82
        $region14: #{run_logits.1} parent=11 // pred_check_branch
          %256 = sbr.rel (%p254) target = $region16
        $region15: #{run_logits.1} parent=11 // pred_region
          _
        $region16: #{run_logits.1} parent=11 // pred_fallthru
          _
        // Predicated region
        $region17: #{run_logits.1} parent=11 // pred_check
          %p257 = pneg %p103
        $region18: #{run_logits.1} parent=11 // pred_check_branch
          %259 = sbr.rel (%p257) target = $region20
        $region19: #{run_logits.1} parent=11 // pred_region
          _
        $region20: #{run_logits.1} parent=11 // pred_fallthru
          _
        // Predicated region
        $region21: #{run_logits.1} parent=11 // pred_check
          %p260 = pneg %p124
        $region22: #{run_logits.1} parent=11 // pred_check_branch
          %262 = sbr.rel (%p260) target = $region24
        $region23: #{run_logits.1} parent=11 // pred_region
          _
        $region24: #{run_logits.1} parent=11 // pred_fallthru
          _
        // Predicated region
        $region25: #{run_logits.1} parent=11 // pred_check
          %p263 = pneg %p145
        $region26: #{run_logits.1} parent=11 // pred_check_branch
          %265 = sbr.rel (%p263) target = $region28
        $region27: #{run_logits.1} parent=11 // pred_region
          _
        $region28: #{run_logits.1} parent=11 // pred_fallthru
          _
        // Predicated region
        $region29: #{run_logits.1} parent=11 // pred_check
          %p266 = pneg %p166
        $region30: #{run_logits.1} parent=11 // pred_check_branch
          %268 = sbr.rel (%p266) target = $region32
        $region31: #{run_logits.1} parent=11 // pred_region
          _
        $region32: #{run_logits.1} parent=11 // pred_fallthru
          _
        // Predicated region
        $region33: #{run_logits.1} parent=11 // pred_check
          %p269 = pneg %p187
        $region34: #{run_logits.1} parent=11 // pred_check_branch
          %271 = sbr.rel (%p269) target = $region36
        $region35: #{run_logits.1} parent=11 // pred_region
          _
        $region36: #{run_logits.1} parent=11 // pred_fallthru
          _
      $region12: #{run_logits.1} parent=5 // pred_fallthru
        _
      %p272 = scmp.lt.s32.totalorder %s21, 8
      // Predicated region
      $region37: #{run_logits.1} parent=5 // pred_check
        %p273 = pneg %p272
      $region38: #{run_logits.1} parent=5 // pred_check_branch
        %275 = sbr.rel (%p273) target = $region40
      $region39: #{run_logits.1} parent=5 // pred_region
        // Predicated region
        $region41: #{run_logits.1} parent=39 // pred_check
          %p276 = pneg %p55
        $region42: #{run_logits.1} parent=39 // pred_check_branch
          %278 = sbr.rel (%p276) target = $region44
        $region43: #{run_logits.1} parent=39 // pred_region
          %s279 = smul.u32 8, %s29
          %p280 = scmp.lt.s32.totalorder %s28, 1
          %s281 = scalar_select %p280, %s28, 1
          %p282 = scmp.lt.s32.totalorder %s279, 31
          %s283 = scalar_select %p282, %s279, 31
          %s284 = smul.addr %s281, 32
          %s285 = sadd.s32 %s283, %s284
          %s286 = smul.addr %s285, 4
          %s287 = scalar_lea.vmem %s0, %s286
          %s288 = smul.u32 8, %s29
        $region44: #{run_logits.1} parent=39 // pred_fallthru
          _
      $region40: #{run_logits.1} parent=5 // pred_fallthru
        _
      %p289 = scmp.le.s32.totalorder 1, %s21
      %p290 = scmp.lt.s32.totalorder %s21, 9
      %p291 = pnand %p289, %p290
      %p292 = pneg %p291
      // Predicated region
      $region45: #{run_logits.1} parent=5 // pred_check
        _
      $region46: #{run_logits.1} parent=5 // pred_check_branch
        %294 = sbr.rel (%p291) target = $region48
      $region47: #{run_logits.1} parent=5 // pred_region
        %s295 = ssub.s32 %s21, 1
        %s296 = smul.u32 8, %s31
        %p297 = scmp.lt.s32.totalorder %s30, 1
        %s298 = scalar_select %p297, %s30, 1
        %p299 = scmp.lt.s32.totalorder %s296, 31
        %s300 = scalar_select %p299, %s296, 31
        %s301 = smul.addr %s298, 32
        %s302 = sadd.s32 %s300, %s301
        %s303 = smul.addr %s302, 4
        %s304 = scalar_lea.vmem %s0, %s303
        %p305 = pneg %p61
        %p306 = pneg %p58
        %p307 = pneg %p82
        %p308 = pneg %p79
        %p309 = pneg %p103
        %p310 = pneg %p100
        %p311 = pneg %p124
        %p312 = pneg %p121
        %p313 = pneg %p145
        %p314 = pneg %p142
        %p315 = pneg %p166
        %p316 = pneg %p163
        %p317 = pneg %p187
        %p318 = pneg %p184
        %p319 = pneg %p213
        %p320 = pneg %p210
        %s321 = sand.u32 %s200, 1
        %s322 = scalar_lea.sflag [#allocation4], %s321
        %s323 = sand.u32 %s200, 1
        %s324 = scalar_lea.vmem [#allocation3], %s323
        %p325 = pneg %p239
        %p326 = pneg %p236
        %s327 = sand.u32 %s226, 1
        %s328 = scalar_lea.sflag [#allocation6], %s327
        %s329 = sand.u32 %s226, 1
        %s330 = scalar_lea.vmem [#allocation5], %s329
        %s331 = smul.u32 8, %s31
        %p332 = scmp.lt.s32.totalorder %s30, 1
        %s333 = scalar_select %p332, %s30, 1
        %p334 = scmp.lt.s32.totalorder %s331, 31
        %s335 = scalar_select %p334, %s331, 31
        %s336 = smul.addr %s333, 32
        %s337 = sadd.s32 %s335, %s336
        %s338 = smul.addr %s337, 4
        %s339 = scalar_lea.vmem %s0, %s338
        %s340 = smul.u32 8, %s31
        %p342 = scmp.eq.s32.totalorder %s31, 0
        // Predicated region
        $region49: #{run_logits.1} parent=47 // pred_check
          %p343 = pneg %p342
        $region50: #{run_logits.1} parent=47 // pred_check_branch
          %345 = sbr.rel (%p343) target = $region52
        $region51: #{run_logits.1} parent=47 // pred_region
          %346 = vst [vmem:[#allocation2] sm:$0x1] 0.0
        $region52: #{run_logits.1} parent=47 // pred_fallthru
          _
        %v347 = vld [vmem:[%s339] sm:$0xf]
        %v348 = vld [vmem:[%s339 + $0x4] sm:$0xf]
        %v349 = vld [vmem:[%s339 + $0x8] sm:$0xf]
        %v350 = vld [vmem:[%s339 + $0xc] sm:$0xf]
        %v351 = vld [vmem:[%s339 + $0x10] sm:$0xf]
        %v352 = vld [vmem:[%s339 + $0x14] sm:$0xf]
        %v353 = vld [vmem:[%s339 + $0x18] sm:$0xf]
        %v354 = vld [vmem:[%s339 + $0x1c] sm:$0xf]
        %v355 = vld [vmem:[%s1] sm:$0xf]
        %v356 = vld [vmem:[%s1 + $0x4] sm:$0xf]
        %v357 = vld [vmem:[%s1 + $0x8] sm:$0xf]
        %v358 = vld [vmem:[%s1 + $0xc] sm:$0x3]
        %v359 = vld [vmem:[%s2] sm:$0x1]
        %v361 = vlaneseq
        %v362 = vshrl.u32 %v361, 7
        %v363 = vsub.s32 0, %v362
        %v364 = vrot.slane %v359, %v363
        %v374 = vunpack.c.l.b16 %v347
        %v375 = vunpack.c.l.b16 %v348
        %v376 = vunpack.c.l.b16 %v349
        %v377 = vunpack.c.l.b16 %v350
        %v378 = vunpack.c.l.b16 %v351
        %v379 = vunpack.c.l.b16 %v352
        %v380 = vunpack.c.l.b16 %v353
        %v381 = vunpack.c.l.b16 %v354
        %v382 = vpack.c.b16 %v375, %v374
        %v383 = vpack.c.b16 %v377, %v376
        %v384 = vpack.c.b16 %v379, %v378
        %v385 = vpack.c.b16 %v381, %v380
        %v390 = vunpack.c.l.b16 %v355
        %v391 = vunpack.c.l.b16 %v356
        %v392 = vunpack.c.l.b16 %v357
        %v393 = vunpack.c.l.b16 %v358
        %v394 = vpack.c.b16 %v391, %v390
        %v395 = vpack.c.b16 %v393, %v392
        %vm397 = vcmask 220160
        %v399 = vsel %vm397, %v382, 0
        %v402 = vsel %vm397, %v383, 0
        %v405 = vsel %vm397, %v384, 0
        %v408 = vsel %vm397, %v385, 0
        %vm410 = vcmask 1044480
        %vm411 = vcmask 1045504
        %v412 = vsel %vm410, 4294967295, 65535
        %v413 = vsel %vm411, %v412, 0
        %v415 = vand.u32 %v395, %v413
        %417 = vmatprep.subr.bf16.mxu0 0
        %418 = vmatpush1.bf16.msra.mxu0 %v394
        %419 = vmatprep.subr.bf16.mxu0 0
        %420 = vmatpush1.bf16.msra.mxu0 %v415
        %421 = vmatprep.subr.bf16.mxu0 0
        %422 = vmatpush1.bf16.msra.mxu0 0
        %423 = vmatprep.subr.bf16.mxu0 0
        %424 = vmatpush1.bf16.msra.mxu0 0
        %425 = vmatprep.subr.bf16.mxu0 0
        %426 = vmatpush1.bf16.msra.mxu0 0
        %427 = vmatprep.subr.bf16.mxu0 0
        %428 = vmatpush1.bf16.msra.mxu0 0
        %429 = vmatprep.subr.bf16.mxu0 0
        %430 = vmatpush1.bf16.msra.mxu0 0
        %431 = vmatprep.subr.bf16.mxu0 0
        %432 = vmatpush1.bf16.msra.mxu0 0
        %433 = vmatprep.subr.bf16.mxu0 0
        %434 = vmatpush1.bf16.msra.mxu0 0
        %435 = vmatprep.subr.bf16.mxu0 0
        %436 = vmatpush1.bf16.msra.mxu0 0
        %437 = vmatprep.subr.bf16.mxu0 0
        %438 = vmatpush1.bf16.msra.mxu0 0
        %439 = vmatprep.subr.bf16.mxu0 0
        %440 = vmatpush1.bf16.msra.mxu0 0
        %441 = vmatprep.subr.bf16.mxu0 0
        %442 = vmatpush1.bf16.msra.mxu0 0
        %443 = vmatprep.subr.bf16.mxu0 0
        %444 = vmatpush1.bf16.msra.mxu0 0
        %445 = vmatprep.subr.bf16.mxu0 0
        %446 = vmatpush1.bf16.msra.mxu0 0
        %447 = vmatprep.subr.bf16.mxu0 0
        %448 = vmatpush1.bf16.msra.mxu0 0
        %449 = vmatprep.mubr.bf16.mxu0 0
        %450 = vmatmul.mubr.bf16.gmra.mrb[0].mxu0 %v399
        %v451 = vpop.f32.mrb[0].mxu0
        %v452 = vadd.f32 %v364, %v451
        %v453 = vpop.f32.mrb[0].mxu0
        %v454 = vpop.f32.mrb[0].mxu0
        %v455 = vadd.f32 %v364, %v454
        %v456 = vpop.f32.mrb[0].mxu0
        %457 = vmatprep.mubr.bf16.mxu0 0
        %458 = vmatmul.mubr.bf16.gmra.mrb[0].mxu0 %v402
        %v459 = vpop.f32.mrb[0].mxu0
        %v460 = vadd.f32 %v364, %v459
        %v461 = vpop.f32.mrb[0].mxu0
        %v462 = vpop.f32.mrb[0].mxu0
        %v463 = vadd.f32 %v364, %v462
        %v464 = vpop.f32.mrb[0].mxu0
        %465 = vmatprep.mubr.bf16.mxu0 0
        %466 = vmatmul.mubr.bf16.gmra.mrb[0].mxu0 %v405
        %v467 = vpop.f32.mrb[0].mxu0
        %v468 = vadd.f32 %v364, %v467
        %v469 = vpop.f32.mrb[0].mxu0
        %v470 = vpop.f32.mrb[0].mxu0
        %v471 = vadd.f32 %v364, %v470
        %v472 = vpop.f32.mrb[0].mxu0
        %473 = vmatprep.mubr.bf16.mxu0 0
        %474 = vmatmul.mubr.bf16.gmra.mrb[0].mxu0 %v408
        %v475 = vpop.f32.mrb[0].mxu0
        %v476 = vadd.f32 %v364, %v475
        %v477 = vpop.f32.mrb[0].mxu0
        %v478 = vpop.f32.mrb[0].mxu0
        %v479 = vadd.f32 %v364, %v478
        %v480 = vpop.f32.mrb[0].mxu0
        %481 = vdwg.mxu0
        %v482 = vmax.f32 %v452, 0.0
        %v483 = vmax.f32 %v455, 0.0
        %v484 = vmax.f32 %v460, 0.0
        %v485 = vmax.f32 %v463, 0.0
        %v486 = vmax.f32 %v468, 0.0
        %v487 = vmax.f32 %v471, 0.0
        %v488 = vmax.f32 %v476, 0.0
        %v489 = vmax.f32 %v479, 0.0
        %v490 = vmax.f32 %v482, 1e-06
        %v491 = vmax.f32 %v483, 1e-06
        %v492 = vmax.f32 %v484, 1e-06
        %v493 = vmax.f32 %v485, 1e-06
        %v494 = vmax.f32 %v486, 1e-06
        %v495 = vmax.f32 %v487, 1e-06
        %v496 = vmax.f32 %v488, 1e-06
        %v497 = vmax.f32 %v489, 1e-06
        %v498 = vld [vmem:[#allocation2] sm:$0x1]
        %v499 = vmul.f32 %v490, %v490
        %v500 = vmul.f32 %v491, %v491
        %v501 = vmul.f32 %v492, %v492
        %v502 = vmul.f32 %v493, %v493
        %v503 = vmul.f32 %v494, %v494
        %v504 = vmul.f32 %v495, %v495
        %v505 = vmul.f32 %v496, %v496
        %v506 = vmul.f32 %v497, %v497
        %v507 = vmul.f32 %v499, %v490
        %v508 = vmul.f32 %v500, %v491
        %v509 = vmul.f32 %v501, %v492
        %v510 = vmul.f32 %v502, %v493
        %v511 = vmul.f32 %v503, %v494
        %v512 = vmul.f32 %v504, %v495
        %v513 = vmul.f32 %v505, %v496
        %v514 = vmul.f32 %v506, %v497
        %v515 = vadd.f32 %v507, %v508
        %v516 = vadd.f32 %v515, %v509
        %v517 = vadd.f32 %v516, %v510
        %v518 = vadd.f32 %v517, %v511
        %v519 = vadd.f32 %v518, %v512
        %v520 = vadd.f32 %v519, %v513
        %v521 = vadd.f32 %v520, %v514
        %v522 = vrot.slane %v521, 4
        %v523 = vadd.f32 %v521, %v522
        %v524 = vrot.slane %v523, 2
        %v525 = vadd.f32 %v523, %v524
        %v526 = vrot.slane %v525, 1
        %v527 = vadd.f32 %v525, %v526
        %v528 = vadd.f32 %v498, %v527
        %529 = vst [vmem:[#allocation2] sm:$0x1] %v528
        %p530 = scmp.eq.s32.totalorder %s31, 3
        // Predicated region
        $region53: #{run_logits.1} parent=47 // pred_check
          %p531 = pneg %p530
        $region54: #{run_logits.1} parent=47 // pred_check_branch
          %533 = sbr.rel (%p531) target = $region56
        $region55: #{run_logits.1} parent=47 // pred_region
          %v534 = vld [vmem:[#allocation2] sm:$0x1]
          %v535 = vmul.f32 %v534, 0.00390625
          %v536 = vlog2.pop %v535
          %v537 = vmul.f32 %v536, 0.6931472
          %v538 = vmul.f32 %v537, 0.33333334
          %v539 = vmul.f32 %v538, 1.442695
          %v540 = vpow.pop %v539
          %v541 = vld [vmem:[%s3] sm:$0xff]
          %v542 = vld [vmem:[%s3 + $0x8] sm:$0xff]
          %v543 = vld [vmem:[%s3 + $0x10] sm:$0xff]
          %v544 = vld [vmem:[%s3 + $0x18] sm:$0xff]
          %v545 = vld [vmem:[%s3 + $0x20] sm:$0xff]
          %v546 = vld [vmem:[%s3 + $0x28] sm:$0xff]
          %v547 = vld [vmem:[%s3 + $0x30] sm:$0xff]
          %v548 = vld [vmem:[%s3 + $0x38] sm:$0xff]
          %v549 = vld [vmem:[%s3 + $0x40] sm:$0xff]
          %v550 = vld [vmem:[%s3 + $0x48] sm:$0xff]
          %v551 = vld [vmem:[%s3 + $0x50] sm:$0xff]
          %v552 = vld [vmem:[%s3 + $0x58] sm:$0xff]
          %v553 = vld [vmem:[%s3 + $0x60] sm:$0xff]
          %v554 = vld [vmem:[%s3 + $0x68] sm:$0xff]
          %v555 = vld [vmem:[%s3 + $0x70] sm:$0xff]
          %v556 = vld [vmem:[%s3 + $0x78] sm:$0xff]
          %v557 = vld [vmem:[%s4] sm:$0x1]
          %558 = vmatprep.subr.mxu0 0.0
          %559 = vmatpush1.msra.mxu0 %v541
          %560 = vmatprep.subr.mxu0 0.0
          %561 = vmatpush1.msra.mxu0 %v542
          %562 = vmatprep.subr.mxu0 0.0
          %563 = vmatpush1.msra.mxu0 %v543
          %564 = vmatprep.subr.mxu0 0.0
          %565 = vmatpush1.msra.mxu0 %v544
          %566 = vmatprep.subr.mxu0 0.0
          %567 = vmatpush1.msra.mxu0 %v545
          %568 = vmatprep.subr.mxu0 0.0
          %569 = vmatpush1.msra.mxu0 %v546
          %570 = vmatprep.subr.mxu0 0.0
          %571 = vmatpush1.msra.mxu0 %v547
          %572 = vmatprep.subr.mxu0 0.0
          %573 = vmatpush1.msra.mxu0 %v548
          %574 = vmatprep.subr.mxu0 0.0
          %575 = vmatpush1.msra.mxu0 %v549
          %576 = vmatprep.subr.mxu0 0.0
          %577 = vmatpush1.msra.mxu0 %v550
          %578 = vmatprep.subr.mxu0 0.0
          %579 = vmatpush1.msra.mxu0 %v551
          %580 = vmatprep.subr.mxu0 0.0
          %581 = vmatpush1.msra.mxu0 %v552
          %582 = vmatprep.subr.mxu0 0.0
          %583 = vmatpush1.msra.mxu0 %v553
          %584 = vmatprep.subr.mxu0 0.0
          %585 = vmatpush1.msra.mxu0 %v554
          %586 = vmatprep.subr.mxu0 0.0
          %587 = vmatpush1.msra.mxu0 %v555
          %588 = vmatprep.subr.mxu0 0.0
          %589 = vmatpush1.msra.mxu0 %v556
          %590 = vmatprep.subr.mxu0 0.0
          %591 = vmatpush1.msra.mxu0 0.0
          %592 = vmatprep.subr.mxu0 0.0
          %593 = vmatpush1.msra.mxu0 0.0
          %594 = vmatprep.subr.mxu0 0.0
          %595 = vmatpush1.msra.mxu0 0.0
          %596 = vmatprep.subr.mxu0 0.0
          %597 = vmatpush1.msra.mxu0 0.0
          %598 = vmatprep.subr.mxu0 0.0
          %599 = vmatpush1.msra.mxu0 0.0
          %600 = vmatprep.subr.mxu0 0.0
          %601 = vmatpush1.msra.mxu0 0.0
          %602 = vmatprep.subr.mxu0 0.0
          %603 = vmatpush1.msra.mxu0 0.0
          %604 = vmatprep.subr.mxu0 0.0
          %605 = vmatpush1.msra.mxu0 0.0
          %606 = vmatprep.subr.mxu0 0.0
          %607 = vmatpush1.msra.mxu0 0.0
          %608 = vmatprep.subr.mxu0 0.0
          %609 = vmatpush1.msra.mxu0 0.0
          %610 = vmatprep.subr.mxu0 0.0
          %611 = vmatpush1.msra.mxu0 0.0
          %612 = vmatprep.subr.mxu0 0.0
          %613 = vmatpush1.msra.mxu0 0.0
          %614 = vmatprep.subr.mxu0 0.0
          %615 = vmatpush1.msra.mxu0 0.0
          %616 = vmatprep.subr.mxu0 0.0
          %617 = vmatpush1.msra.mxu0 0.0
          %618 = vmatprep.subr.mxu0 0.0
          %619 = vmatpush1.msra.mxu0 0.0
          %620 = vmatprep.subr.mxu0 0.0
          %621 = vmatpush1.msra.mxu0 0.0
          %622 = vmatprep.mubr.f32.mxu0 0.0
          %623 = vmatmul.mubr.f32.gmra.mrb[0].mxu0 %v540
          %v624 = vpop.f32.mrb[0].mxu0
          %v625 = vadd.f32 %v557, %v624
          %v626 = vpop.f32.mrb[0].mxu0
          %627 = vdwg.mxu0
          %vm628 = vcmask 253952
          %629 = vst.msk [vmem:[%s324] sm:$0x1] %vm628, %v625
          %v630 = vld [vmem:[%s5] sm:$0xff]
          %v631 = vld [vmem:[%s5 + $0x8] sm:$0xff]
          %v632 = vld [vmem:[%s5 + $0x10] sm:$0xff]
          %v633 = vld [vmem:[%s5 + $0x18] sm:$0xff]
          %v634 = vld [vmem:[%s6] sm:$0x1]
          %vm635 = vcmask 261120
          %v637 = vsel %vm635, %v625, 0
          %639 = vmatprep.subr.mxu0 0.0
          %640 = vmatpush1.msra.mxu0 %v630
          %641 = vmatprep.subr.mxu0 0.0
          %642 = vmatpush1.msra.mxu0 %v631
          %643 = vmatprep.subr.mxu0 0.0
          %644 = vmatpush1.msra.mxu0 %v632
          %645 = vmatprep.subr.mxu0 0.0
          %646 = vmatpush1.msra.mxu0 %v633
          %647 = vmatprep.subr.mxu0 0.0
          %648 = vmatpush1.msra.mxu0 0.0
          %649 = vmatprep.subr.mxu0 0.0
          %650 = vmatpush1.msra.mxu0 0.0
          %651 = vmatprep.subr.mxu0 0.0
          %652 = vmatpush1.msra.mxu0 0.0
          %653 = vmatprep.subr.mxu0 0.0
          %654 = vmatpush1.msra.mxu0 0.0
          %655 = vmatprep.subr.mxu0 0.0
          %656 = vmatpush1.msra.mxu0 0.0
          %657 = vmatprep.subr.mxu0 0.0
          %658 = vmatpush1.msra.mxu0 0.0
          %659 = vmatprep.subr.mxu0 0.0
          %660 = vmatpush1.msra.mxu0 0.0
          %661 = vmatprep.subr.mxu0 0.0
          %662 = vmatpush1.msra.mxu0 0.0
          %663 = vmatprep.subr.mxu0 0.0
          %664 = vmatpush1.msra.mxu0 0.0
          %665 = vmatprep.subr.mxu0 0.0
          %666 = vmatpush1.msra.mxu0 0.0
          %667 = vmatprep.subr.mxu0 0.0
          %668 = vmatpush1.msra.mxu0 0.0
          %669 = vmatprep.subr.mxu0 0.0
          %670 = vmatpush1.msra.mxu0 0.0
          %671 = vmatprep.subr.mxu0 0.0
          %672 = vmatpush1.msra.mxu0 0.0
          %673 = vmatprep.subr.mxu0 0.0
          %674 = vmatpush1.msra.mxu0 0.0
          %675 = vmatprep.subr.mxu0 0.0
          %676 = vmatpush1.msra.mxu0 0.0
          %677 = vmatprep.subr.mxu0 0.0
          %678 = vmatpush1.msra.mxu0 0.0
          %679 = vmatprep.subr.mxu0 0.0
          %680 = vmatpush1.msra.mxu0 0.0
          %681 = vmatprep.subr.mxu0 0.0
          %682 = vmatpush1.msra.mxu0 0.0
          %683 = vmatprep.subr.mxu0 0.0
          %684 = vmatpush1.msra.mxu0 0.0
          %685 = vmatprep.subr.mxu0 0.0
          %686 = vmatpush1.msra.mxu0 0.0
          %687 = vmatprep.subr.mxu0 0.0
          %688 = vmatpush1.msra.mxu0 0.0
          %689 = vmatprep.subr.mxu0 0.0
          %690 = vmatpush1.msra.mxu0 0.0
          %691 = vmatprep.subr.mxu0 0.0
          %692 = vmatpush1.msra.mxu0 0.0
          %693 = vmatprep.subr.mxu0 0.0
          %694 = vmatpush1.msra.mxu0 0.0
          %695 = vmatprep.subr.mxu0 0.0
          %696 = vmatpush1.msra.mxu0 0.0
          %697 = vmatprep.subr.mxu0 0.0
          %698 = vmatpush1.msra.mxu0 0.0
          %699 = vmatprep.subr.mxu0 0.0
          %700 = vmatpush1.msra.mxu0 0.0
          %701 = vmatprep.subr.mxu0 0.0
          %702 = vmatpush1.msra.mxu0 0.0
          %703 = vmatprep.mubr.f32.mxu0 0.0
          %704 = vmatmul.mubr.f32.gmra.mrb[0].mxu0 %v637
          %v705 = vpop.f32.mrb[0].mxu0
          %v706 = vadd.f32 %v634, %v705
          %v707 = vpop.f32.mrb[0].mxu0
          %708 = vdwg.mxu0
          %vm709 = vcmask 73728
          %710 = vst.msk [vmem:[%s330] sm:$0x1] %vm709, %v706
        $region56: #{run_logits.1} parent=47 // pred_fallthru
          _
        %s711 = sand.u32 %s200, 1
        %s712 = scalar_lea.sflag [#allocation4], %s711
        %s713 = sand.u32 %s200, 1
        %s714 = scalar_lea.vmem [#allocation3], %s713
        %s715 = sand.u32 %s226, 1
        %s716 = scalar_lea.sflag [#allocation6], %s715
        %s717 = sand.u32 %s226, 1
        %s718 = scalar_lea.vmem [#allocation5], %s717
        // Predicated region
        $region57: #{run_logits.1} parent=47 // pred_check
          %p719 = pneg %p210
        $region58: #{run_logits.1} parent=47 // pred_check_branch
          %721 = sbr.rel (%p719) target = $region60
        $region59: #{run_logits.1} parent=47 // pred_region
          %s723 = ssub.s32 16, 16
          %724 = vsyncadd %s712, %s723
          %s725 = smul.addr %s30, 16
          %s726 = scalar_lea.hbm %s7, %s725
          %s728 = sshll.u32 %s714, 4
          %s729 = int_to_ptr.vmem [resolvable:$true] %s728
          %731 = dma.vmem_to_hbm [thread:$0]  %s729, 16, %s726, %s712
        $region60: #{run_logits.1} parent=47 // pred_fallthru
          _
        // Predicated region
        $region61: #{run_logits.1} parent=47 // pred_check
          %p732 = pneg %p236
        $region62: #{run_logits.1} parent=47 // pred_check_branch
          %734 = sbr.rel (%p732) target = $region64
        $region63: #{run_logits.1} parent=47 // pred_region
          %s736 = ssub.s32 16, 16
          %737 = vsyncadd %s716, %s736
          %s738 = smul.addr %s30, 16
          %s739 = scalar_lea.hbm %s8, %s738
          %s741 = sshll.u32 %s718, 4
          %s742 = int_to_ptr.vmem [resolvable:$true] %s741
          %744 = dma.vmem_to_hbm [thread:$0]  %s742, 16, %s739, %s716
        $region64: #{run_logits.1} parent=47 // pred_fallthru
          _
      $region48: #{run_logits.1} parent=5 // pred_fallthru
        _
      %p745 = scmp.le.s32.totalorder 2, %s21
      // Predicated region
      $region65: #{run_logits.1} parent=5 // pred_check
        %p746 = pneg %p745
      $region66: #{run_logits.1} parent=5 // pred_check_branch
        %748 = sbr.rel (%p746) target = $region68
      $region67: #{run_logits.1} parent=5 // pred_region
        %s749 = ssub.s32 %s21, 2
        // Predicated region
        $region69: #{run_logits.1} parent=67 // pred_check
          %p750 = pneg %p216
        $region70: #{run_logits.1} parent=67 // pred_check_branch
          %752 = sbr.rel (%p750) target = $region72
        $region71: #{run_logits.1} parent=67 // pred_region
          %s753 = sand.u32 %s201, 1
          %s754 = scalar_lea.sflag [#allocation4], %s753
          %s755 = sand.u32 %s201, 1
          %s756 = scalar_lea.vmem [#allocation3], %s755
          %757 = dma.done %s754, 16
        $region72: #{run_logits.1} parent=67 // pred_fallthru
          _
        // Predicated region
        $region73: #{run_logits.1} parent=67 // pred_check
          %p758 = pneg %p242
        $region74: #{run_logits.1} parent=67 // pred_check_branch
          %760 = sbr.rel (%p758) target = $region76
        $region75: #{run_logits.1} parent=67 // pred_region
          %s761 = sand.u32 %s227, 1
          %s762 = scalar_lea.sflag [#allocation6], %s761
          %s763 = sand.u32 %s227, 1
          %s764 = scalar_lea.vmem [#allocation5], %s763
          %765 = dma.done %s762, 16
        $region76: #{run_logits.1} parent=67 // pred_fallthru
          _
      $region68: #{run_logits.1} parent=5 // pred_fallthru
        _
    $region6: #{run_logits.1} parent=1 // loop_footer
      %s25 = sadd.s32 1, %s21
    $region7: #{run_logits.1} parent=1 // loop_footer_branch
      %20 = sbr.rel target = $region3
    $region8: #{run_logits.1} parent=1 // loop_exit
      _
    %766 = vsyncpa [#allocation4], 1
    %s767 = scalar_lea.sflag [#allocation4], 1
    %768 = vsyncpa %s767, 1
    %769 = vsyncpa [#allocation6], 1
    %s770 = scalar_lea.sflag [#allocation6], 1
    %771 = vsyncpa %s770, 1

</llo_original>
